<compile_context>
chip_gen: v6e
topology: v6e:2x2x1
jax: 0.10.0
libtpu: 0.0.40
codegen_flags: <defaults>
</compile_context>

<pallas_src>
import functools

import numpy as np
import jax
import jax.numpy as jnp
from jax.experimental import pallas as pl
from jax.experimental.pallas import tpu as pltpu


def _critic_kernel(s_ref, a_ref, w1s_ref, w1a_ref, b1_ref, w2_ref, b2_ref,
                   w3_ref, b3_ref, o_ref):
    # s_ref: (TB, S), a_ref: (TB, A); weights (in, out); biases (1, out) f32;
    # w3_ref: (8, H) replicated head row; o_ref: (1, TB) lane-dense output row.
    f32 = jnp.float32

    # Fused concat: h1 = s @ w1_s + a @ w1_a + b1   (f32 accumulation).
    h1 = (jnp.dot(s_ref[...], w1s_ref[...], preferred_element_type=f32)
          + jnp.dot(a_ref[...], w1a_ref[...], preferred_element_type=f32)
          + b1_ref[...])
    h1 = jnp.maximum(h1, 0.0)

    h2 = (jnp.dot(h1.astype(w2_ref.dtype), w2_ref[...],
                  preferred_element_type=f32)
          + b2_ref[...])
    h2 = jnp.maximum(h2, 0.0)

    # Head as w3 @ h2^T (trans-B dot, flash-attention style): result is a
    # lane-dense (8, TB) tile; all 8 rows are identical, keep row 0.
    q8 = jax.lax.dot_general(
        w3_ref[...], h2.astype(w3_ref.dtype),
        dimension_numbers=(((1,), (1,)), ((), ())),
        preferred_element_type=f32)
    o_ref[...] = q8[0:1, :] + b3_ref[...]


def _round_up(x, m):
    return ((x + m - 1) // m) * m


@functools.partial(jax.jit, static_argnames=("tile_b", "input_dtype"))
def critic_forward(s, a, params, *, tile_b=None, input_dtype=jnp.float32):
    """s: (B, state_size), a: (B, action_size)  ->  (B, 1) float32."""
    w1s, w1a, b1, w2, b2, w3_row, b3 = params
    mx_dtype = np.dtype(input_dtype)           # MXU input dtype (f32 or bf16)

    B, S = s.shape
    A = a.shape[1]
    H = w2.shape[0]

    s = s.astype(mx_dtype)
    a = a.astype(mx_dtype)
    w1s = w1s.astype(mx_dtype)
    w1a = w1a.astype(mx_dtype)
    w2 = w2.astype(mx_dtype)
    # Replicate the head row to 8 sublanes so the head matmul's M dim is
    # sublane-aligned; only row 0 of the result is used.
    w3_8 = jnp.broadcast_to(w3_row.astype(mx_dtype), (8, H))
    b1 = b1.astype(jnp.float32)
    b2 = b2.astype(jnp.float32)
    b3 = b3.astype(jnp.float32)

    # Batch-tile selection: per-step pipeline overhead (~0.35 us) dominates for
    # small tiles, so go big; keep >=2 grid steps for large batches so v7x can
    # shard them across its 2 TensorCores.  tile_b=2048 is ~7 MiB of VMEM,
    # inside every generation's scoped default.
    if tile_b is None:
        if B <= 1024:
            tile_b = _round_up(max(B, 8), 8)                 # single-step path
        else:
            tile_b = min(2048, _round_up((B + 1) // 2, 8))   # >=2 steps
    tile_b = max(8, _round_up(int(tile_b), 8))
    n_blocks = pl.cdiv(B, tile_b)

    weight_spec = lambda shape: pl.BlockSpec(shape, lambda i: (0, 0))

    itemsize = mx_dtype.itemsize
    cost = pl.CostEstimate(
        flops=2 * B * ((S + A) * H + H * H + 8 * H),
        transcendentals=0,
        bytes_accessed=(B * (S + A) * itemsize                # streamed inputs
                        + B * 4                               # output
                        + ((S + A) * H + H * H + 8 * H) * itemsize
                        + (2 * H + 1) * 4),                   # biases
    )

    out = pl.pallas_call(
        _critic_kernel,
        out_shape=jax.ShapeDtypeStruct((n_blocks, 1, tile_b), jnp.float32),
        grid=(n_blocks,),
        in_specs=[
            pl.BlockSpec((tile_b, S), lambda i: (i, 0)),   # s tile (streams)
            pl.BlockSpec((tile_b, A), lambda i: (i, 0)),   # a tile (streams)
            weight_spec((S, H)),                           # w1_s (VMEM-resident)
            weight_spec((A, H)),                           # w1_a
            weight_spec((1, H)),                           # b1
            weight_spec((H, H)),                           # w2
            weight_spec((1, H)),                           # b2
            weight_spec((8, H)),                           # w3 replicated rows
            weight_spec((1, 1)),                           # b3
        ],
        out_specs=pl.BlockSpec((None, 1, tile_b), lambda i: (i, 0, 0)),
        compiler_params=pltpu.CompilerParams(
            dimension_semantics=("parallel",),             # 2x TC on v7x
            vmem_limit_bytes=32 * 1024 * 1024),
        cost_estimate=cost,
    )(s, a, w1s, w1a, b1, w2, b2, w3_8, b3)

    # (n_blocks, 1, tile_b), row-major -> flat batch; drop the ragged tail.
    return out.reshape(n_blocks * tile_b)[:B].reshape(B, 1)


def init_critic_params(key, state_size, hidden_size, action_size):
    """Mimics torch.nn.Linear default init U(-1/sqrt(fan_in), 1/sqrt(fan_in)).

    fc1's weight is split row-wise into (w1_s, w1_a) so the concat is fused
    into the kernel; fc_out's weight is stored as a (1, hidden) row.
    """
    def linear(key, fan_in, fan_out):
        kw, kb = jax.random.split(key)
        bound = 1.0 / jnp.sqrt(jnp.float32(fan_in))
        w = jax.random.uniform(kw, (fan_in, fan_out), jnp.float32, -bound, bound)
        b = jax.random.uniform(kb, (1, fan_out), jnp.float32, -bound, bound)
        return w, b

    k1, k2, k3 = jax.random.split(key, 3)
    w1, b1 = linear(k1, state_size + action_size, hidden_size)
    w1s, w1a = w1[:state_size], w1[state_size:]
    w2, b2 = linear(k2, hidden_size, hidden_size)
    w3, b3 = linear(k3, hidden_size, 1)
    w3_row = w3.reshape(1, hidden_size)
    return (w1s, w1a, b1, w2, b2, w3_row, b3)


def critic_reference(s, a, params):
    w1s, w1a, b1, w2, b2, w3_row, b3 = params
    w1 = jnp.concatenate([w1s, w1a], axis=0)
    x = jnp.concatenate([s, a], axis=1).astype(jnp.float32)
    h1 = jnp.maximum(x @ w1 + b1, 0.0)
    h2 = jnp.maximum(h1 @ w2 + b2, 0.0)
    return h2 @ w3_row.T + b3


if __name__ == "__main__":
    state_size = 12
    action_size = 4
    hidden_size = 32   # model config (128 would be ~free on TPU lanes)

    key = jax.random.PRNGKey(0)
    k_p, k_s, k_a, k_s2, k_a2 = jax.random.split(key, 5)
    params = init_critic_params(k_p, state_size, hidden_size, action_size)

    # 1) Tiny inference-style batch: single grid step, no padding machinery.
    s = jax.random.normal(k_s, (8, state_size), jnp.float32)
    a = jax.random.normal(k_a, (8, action_size), jnp.float32)
    out = jax.block_until_ready(critic_forward(s, a, params))
    ref = critic_reference(s, a, params)
    assert out.shape == (8, 1), out.shape
    assert jnp.allclose(out, ref, atol=1e-5, rtol=1e-5)

    # 2) Non-multiple batch with an explicit small tile: exercises the ragged
    #    last block (no wrapper-side pad) and the multi-step pipeline.
    s2 = jax.random.normal(k_s2, (300, state_size), jnp.float32)
    a2 = jax.random.normal(k_a2, (300, action_size), jnp.float32)
    out2 = jax.block_until_ready(critic_forward(s2, a2, params, tile_b=128))
    ref2 = critic_reference(s2, a2, params)
    assert out2.shape == (300, 1), out2.shape
    assert jnp.allclose(out2, ref2, atol=1e-5, rtol=1e-5)

    # 3) Training-sized batch with the default (large-tile, >=2-step) policy.
    k_s3, k_a3 = jax.random.split(k_p)
    s3 = jax.random.normal(k_s3, (2500, state_size), jnp.float32)
    a3 = jax.random.normal(k_a3, (2500, action_size), jnp.float32)
    out3 = jax.block_until_ready(critic_forward(s3, a3, params))
    ref3 = critic_reference(s3, a3, params)
    assert out3.shape == (2500, 1), out3.shape
    assert jnp.allclose(out3, ref3, atol=1e-5, rtol=1e-5)

    # 4) bf16 MXU-input path (halves the dominant HBM read on v6e/v7x);
    #    f32 accumulation, so compare to the f32 reference loosely.
    out_bf16 = jax.block_until_ready(
        critic_forward(s2, a2, params, input_dtype=jnp.bfloat16))
    assert out_bf16.shape == (300, 1), out_bf16.shape
    assert jnp.allclose(out_bf16, ref2, atol=1e-1, rtol=1e-1)

    print("KERNEL_OK")
</pallas_src>

<mosaic_0001>
module attributes {stable_mosaic.version = 11 : i64} {
  func.func @_critic_kernel(%arg0: i32, %arg1: memref<8x12xf32, #tpu.memory_space<vmem>>, %arg2: memref<8x4xf32, #tpu.memory_space<vmem>>, %arg3: memref<12x32xf32, #tpu.memory_space<vmem>>, %arg4: memref<4x32xf32, #tpu.memory_space<vmem>>, %arg5: memref<1x32xf32, #tpu.memory_space<vmem>>, %arg6: memref<32x32xf32, #tpu.memory_space<vmem>>, %arg7: memref<1x32xf32, #tpu.memory_space<vmem>>, %arg8: memref<8x32xf32, #tpu.memory_space<vmem>>, %arg9: memref<1x1xf32, #tpu.memory_space<vmem>>, %arg10: memref<1x1x8xf32, #tpu.memory_space<vmem>>) attributes {dimension_semantics = [#tpu.dimension_semantics<parallel>], iteration_bounds = array<i64: 1>, scalar_prefetch = 0 : i64, scratch_operands = 0 : i64, tpu.core_type = #tpu.core_type<tc>, window_params = [{transform_indices = @transform_0, window_bounds = array<i64: 8, 12>}, {transform_indices = @transform_1, window_bounds = array<i64: 8, 4>}, {pipeline_mode = #tpu.pipeline_mode<synchronous>, transform_indices = @transform_2, window_bounds = array<i64: 12, 32>}, {pipeline_mode = #tpu.pipeline_mode<synchronous>, transform_indices = @transform_3, window_bounds = array<i64: 4, 32>}, {pipeline_mode = #tpu.pipeline_mode<synchronous>, transform_indices = @transform_4, window_bounds = array<i64: 1, 32>}, {pipeline_mode = #tpu.pipeline_mode<synchronous>, transform_indices = @transform_5, window_bounds = array<i64: 32, 32>}, {pipeline_mode = #tpu.pipeline_mode<synchronous>, transform_indices = @transform_6, window_bounds = array<i64: 1, 32>}, {pipeline_mode = #tpu.pipeline_mode<synchronous>, transform_indices = @transform_7, window_bounds = array<i64: 8, 32>}, {pipeline_mode = #tpu.pipeline_mode<synchronous>, transform_indices = @transform_8, window_bounds = array<i64: 1, 1>}, {transform_indices = @transform_9, window_bounds = array<i64: 1, 1, 8>}]} {
    %c0 = arith.constant 0 : index
    %c0_0 = arith.constant 0 : index
    %0 = vector.load %arg1[%c0, %c0_0] : memref<8x12xf32, #tpu.memory_space<vmem>>, vector<8x12xf32>
    %c0_1 = arith.constant 0 : index
    %c0_2 = arith.constant 0 : index
    %1 = vector.load %arg3[%c0_1, %c0_2] : memref<12x32xf32, #tpu.memory_space<vmem>>, vector<12x32xf32>
    %cst = arith.constant dense<0.000000e+00> : vector<8x32xf32>
    %2 = tpu.matmul %0, %1, %cst {dimension_numbers = #tpu.dot_dimension_numbers<[1], [0], [0], [1], [0, 0, 1, 1], [], []>} : vector<8x12xf32>, vector<12x32xf32>, vector<8x32xf32> -> vector<8x32xf32>
    %c0_3 = arith.constant 0 : index
    %c0_4 = arith.constant 0 : index
    %3 = vector.load %arg2[%c0_3, %c0_4] : memref<8x4xf32, #tpu.memory_space<vmem>>, vector<8x4xf32>
    %c0_5 = arith.constant 0 : index
    %c0_6 = arith.constant 0 : index
    %4 = vector.load %arg4[%c0_5, %c0_6] : memref<4x32xf32, #tpu.memory_space<vmem>>, vector<4x32xf32>
    %cst_7 = arith.constant dense<0.000000e+00> : vector<8x32xf32>
    %5 = tpu.matmul %3, %4, %cst_7 {dimension_numbers = #tpu.dot_dimension_numbers<[1], [0], [0], [1], [0, 0, 1, 1], [], []>} : vector<8x4xf32>, vector<4x32xf32>, vector<8x32xf32> -> vector<8x32xf32>
    %6 = arith.addf %2, %5 : vector<8x32xf32>
    %c0_8 = arith.constant 0 : index
    %c0_9 = arith.constant 0 : index
    %7 = vector.load %arg5[%c0_8, %c0_9] : memref<1x32xf32, #tpu.memory_space<vmem>>, vector<1x32xf32>
    %8 = vector.broadcast %7 : vector<1x32xf32> to vector<8x32xf32>
    %9 = arith.addf %6, %8 : vector<8x32xf32>
    %cst_10 = arith.constant 0.000000e+00 : f32
    %10 = vector.broadcast %cst_10 : f32 to vector<8x32xf32>
    %11 = arith.maximumf %9, %10 : vector<8x32xf32>
    %c0_11 = arith.constant 0 : index
    %c0_12 = arith.constant 0 : index
    %12 = vector.load %arg6[%c0_11, %c0_12] : memref<32x32xf32, #tpu.memory_space<vmem>>, vector<32x32xf32>
    %cst_13 = arith.constant dense<0.000000e+00> : vector<8x32xf32>
    %13 = tpu.matmul %11, %12, %cst_13 {dimension_numbers = #tpu.dot_dimension_numbers<[1], [0], [0], [1], [0, 0, 1, 1], [], []>} : vector<8x32xf32>, vector<32x32xf32>, vector<8x32xf32> -> vector<8x32xf32>
    %c0_14 = arith.constant 0 : index
    %c0_15 = arith.constant 0 : index
    %14 = vector.load %arg7[%c0_14, %c0_15] : memref<1x32xf32, #tpu.memory_space<vmem>>, vector<1x32xf32>
    %15 = vector.broadcast %14 : vector<1x32xf32> to vector<8x32xf32>
    %16 = arith.addf %13, %15 : vector<8x32xf32>
    %cst_16 = arith.constant 0.000000e+00 : f32
    %17 = vector.broadcast %cst_16 : f32 to vector<8x32xf32>
    %18 = arith.maximumf %16, %17 : vector<8x32xf32>
    %c0_17 = arith.constant 0 : index
    %c0_18 = arith.constant 0 : index
    %19 = vector.load %arg8[%c0_17, %c0_18] : memref<8x32xf32, #tpu.memory_space<vmem>>, vector<8x32xf32>
    %cst_19 = arith.constant dense<0.000000e+00> : vector<8x8xf32>
    %20 = tpu.matmul %19, %18, %cst_19 {dimension_numbers = #tpu.dot_dimension_numbers<[1], [1], [0], [0], [0, 0, 1, 0], [], []>} : vector<8x32xf32>, vector<8x32xf32>, vector<8x8xf32> -> vector<8x8xf32>
    %21 = vector.extract_strided_slice %20 {offsets = [0, 0], sizes = [1, 8], strides = [1, 1]} : vector<8x8xf32> to vector<1x8xf32>
    %c0_20 = arith.constant 0 : index
    %c0_21 = arith.constant 0 : index
    %22 = vector.load %arg9[%c0_20, %c0_21] : memref<1x1xf32, #tpu.memory_space<vmem>>, vector<1x1xf32>
    %23 = vector.broadcast %22 : vector<1x1xf32> to vector<1x8xf32>
    %24 = arith.addf %21, %23 : vector<1x8xf32>
    %c0_22 = arith.constant 0 : index
    %c0_23 = arith.constant 0 : index
    %c0_24 = arith.constant 0 : index
    %25 = vector.load %arg10[%c0_22, %c0_23, %c0_24] : memref<1x1x8xf32, #tpu.memory_space<vmem>>, vector<1x1x8xf32>
    %26 = vector.shape_cast %25 : vector<1x1x8xf32> to vector<1x8xf32>
    %27 = vector.shape_cast %24 : vector<1x8xf32> to vector<1x1x8xf32>
    tpu.vector_store %arg10[%c0_22, %c0_23, %c0_24], %27 {strides = array<i32>} : memref<1x1x8xf32, #tpu.memory_space<vmem>>, vector<1x1x8xf32>,
    return
  }
  func.func @transform_0(%arg0: i32) -> (i32, i32) {
    %c0_i32 = arith.constant 0 : i32
    %c0_i32_0 = arith.constant 0 : i32
    return %arg0, %c0_i32 : i32, i32
  }
  func.func @transform_1(%arg0: i32) -> (i32, i32) {
    %c0_i32 = arith.constant 0 : i32
    %c0_i32_0 = arith.constant 0 : i32
    return %arg0, %c0_i32 : i32, i32
  }
  func.func @transform_2(%arg0: i32) -> (i32, i32) {
    %c0_i32 = arith.constant 0 : i32
    %c0_i32_0 = arith.constant 0 : i32
    %c0_i32_1 = arith.constant 0 : i32
    return %c0_i32, %c0_i32_0 : i32, i32
  }
  func.func @transform_3(%arg0: i32) -> (i32, i32) {
    %c0_i32 = arith.constant 0 : i32
    %c0_i32_0 = arith.constant 0 : i32
    %c0_i32_1 = arith.constant 0 : i32
    return %c0_i32, %c0_i32_0 : i32, i32
  }
  func.func @transform_4(%arg0: i32) -> (i32, i32) {
    %c0_i32 = arith.constant 0 : i32
    %c0_i32_0 = arith.constant 0 : i32
    %c0_i32_1 = arith.constant 0 : i32
    return %c0_i32, %c0_i32_0 : i32, i32
  }
  func.func @transform_5(%arg0: i32) -> (i32, i32) {
    %c0_i32 = arith.constant 0 : i32
    %c0_i32_0 = arith.constant 0 : i32
    %c0_i32_1 = arith.constant 0 : i32
    return %c0_i32, %c0_i32_0 : i32, i32
  }
  func.func @transform_6(%arg0: i32) -> (i32, i32) {
    %c0_i32 = arith.constant 0 : i32
    %c0_i32_0 = arith.constant 0 : i32
    %c0_i32_1 = arith.constant 0 : i32
    return %c0_i32, %c0_i32_0 : i32, i32
  }
  func.func @transform_7(%arg0: i32) -> (i32, i32) {
    %c0_i32 = arith.constant 0 : i32
    %c0_i32_0 = arith.constant 0 : i32
    %c0_i32_1 = arith.constant 0 : i32
    return %c0_i32, %c0_i32_0 : i32, i32
  }
  func.func @transform_8(%arg0: i32) -> (i32, i32) {
    %c0_i32 = arith.constant 0 : i32
    %c0_i32_0 = arith.constant 0 : i32
    %c0_i32_1 = arith.constant 0 : i32
    return %c0_i32, %c0_i32_0 : i32, i32
  }
  func.func @transform_9(%arg0: i32) -> (i32, i32, i32) {
    %c0_i32 = arith.constant 0 : i32
    %c0_i32_0 = arith.constant 0 : i32
    %c0_i32_1 = arith.constant 0 : i32
    return %arg0, %c0_i32, %c0_i32_0 : i32, i32, i32
  }
}

</mosaic_0001>

<llo_original>
// kernel: critic_forward.1
$region0: #{critic_forward.1}
  #allocation0 [shape = 'u32[]', space=smem, size = 0x4, offset = 0x4, fixed_abs, tag = 'smem constant byte address 0x4 - core index']
  #allocation1 [shape = 'u32[144,128]{1,0:T(1,128)}', space=vmem, size = 0x12000, scoped, tag = 'internal scratch']
  #allocation2 [shape = 'f32[1,1]{1,0:T(1,128)S(1)}', space=vmem, size = 0x200, scoped, tag = 'scoped memory for critic_forward.1']
  %s0 = inlined_call_operand.hbm [shape: f32[8,12], index: 0, kind: input, shape index: {}]
  %s1 = inlined_call_operand.vmem [shape: f32[8,4], index: 1, kind: input, shape index: {}]
  %s2 = inlined_call_operand.hbm [shape: f32[12,32], index: 2, kind: input, shape index: {}]
  %s3 = inlined_call_operand.hbm [shape: f32[4,32], index: 3, kind: input, shape index: {}]
  %s4 = inlined_call_operand.vmem [shape: f32[1,32], index: 4, kind: input, shape index: {}]
  %s5 = inlined_call_operand.vmem [shape: f32[32,32], index: 5, kind: input, shape index: {}]
  %s6 = inlined_call_operand.vmem [shape: f32[1,32], index: 6, kind: input, shape index: {}]
  %s7 = inlined_call_operand.vmem [shape: f32[8,32], index: 7, kind: input, shape index: {}]
  %s8 = inlined_call_operand.<no memory space> [shape: f32[1,1], index: 8, kind: input, shape index: {}]
  %s9 = inlined_call_operand.hbm [shape: f32[1,1,8], index: 9, kind: output, shape index: {}]
  %s10 = sld [smem:[#allocation0]]
  $region58: #{critic_forward.1} parent=0
    _
  %s12 = ssub.s32 1, %s10
  %s13 = scalar_select 0, %s12, %s10
  %v14 = vstv %s8
  %15 = vst [vmem:[#allocation2] sm:$0x1] %v14
  $region1: #{critic_forward.1} parent=0
    #allocation3 [shape = 'u8[4096]{0}', space=vmem, size = 0x1000, scoped, tag = 'input window, operand 0, single buffered']
    #allocation4 [shape = 's32[1]{0}', space=sflag, size = 0x4, scoped, tag = 'scoped memory for critic_forward.1']
    #allocation5 [shape = 's32[1]{0}', space=sflag, size = 0x4, scoped, tag = 'scoped memory for critic_forward.1']
    #allocation6 [shape = 'u8[8192]{0}', space=vmem, size = 0x2000, scoped, tag = 'input window, operand 2, single buffered']
    #allocation7 [shape = 's32[1]{0}', space=sflag, size = 0x4, scoped, tag = 'scoped memory for critic_forward.1']
    #allocation8 [shape = 'u8[2048]{0}', space=vmem, size = 0x800, scoped, tag = 'input window, operand 3, single buffered']
    #allocation9 [shape = 'u8[512]{0}', space=vmem, size = 0x400, scoped, tag = 'output window, operand 0, single buffered']
    %16 = vsyncpa [#allocation4], 0
    %17 = vsyncpa [#allocation7], 0
    %18 = vsyncpa [#allocation5], 0
    // Predicated region
    $region2: #{critic_forward.1} parent=1 // pred_check
      _
    $region3: #{critic_forward.1} parent=1 // pred_check_branch
      %20 = sbr.rel (0) target = $region5
    $region4: #{critic_forward.1} parent=1 // pred_region
      %s22 = ssub.s32 128, 128
      %23 = vsyncadd [#allocation4], %s22
      %s25 = sshll.u32 [#allocation3], 4
      %s26 = int_to_ptr.vmem [resolvable:$true] %s25
      %28 = dma.hbm_to_vmem [thread:$0]  %s0, 128, %s26, [#allocation4]
    $region5: #{critic_forward.1} parent=1 // pred_fallthru
      _
    // Predicated region
    $region6: #{critic_forward.1} parent=1 // pred_check
      _
    $region7: #{critic_forward.1} parent=1 // pred_check_branch
      %30 = sbr.rel (0) target = $region9
    $region8: #{critic_forward.1} parent=1 // pred_region
      _
    $region9: #{critic_forward.1} parent=1 // pred_fallthru
      _
    // Predicated region
    $region10: #{critic_forward.1} parent=1 // pred_check
      _
    $region11: #{critic_forward.1} parent=1 // pred_check_branch
      %32 = sbr.rel (0) target = $region13
    $region12: #{critic_forward.1} parent=1 // pred_region
      %s34 = ssub.s32 256, 256
      %35 = vsyncadd [#allocation7], %s34
      %s36 = sshll.u32 [#allocation6], 4
      %s37 = int_to_ptr.vmem [resolvable:$true] %s36
      %42 = dma.hbm_to_vmem [thread:$0]  %s2, 256, %s37, [#allocation7], 128, 128, 8
    $region13: #{critic_forward.1} parent=1 // pred_fallthru
      _
    // Predicated region
    $region14: #{critic_forward.1} parent=1 // pred_check
      _
    $region15: #{critic_forward.1} parent=1 // pred_check_branch
      %44 = sbr.rel (0) target = $region17
    $region16: #{critic_forward.1} parent=1 // pred_region
      %s46 = ssub.s32 64, 64
      %47 = vsyncadd [#allocation7], %s46
      %s49 = sshll.u32 [#allocation8], 4
      %s50 = int_to_ptr.vmem [resolvable:$true] %s49
      %52 = dma.hbm_to_vmem [thread:$0]  %s3, 64, %s50, [#allocation7]
    $region17: #{critic_forward.1} parent=1 // pred_fallthru
      _
    // Predicated region
    $region18: #{critic_forward.1} parent=1 // pred_check
      _
    $region19: #{critic_forward.1} parent=1 // pred_check_branch
      %54 = sbr.rel (0) target = $region21
    $region20: #{critic_forward.1} parent=1 // pred_region
      _
    $region21: #{critic_forward.1} parent=1 // pred_fallthru
      _
    // Predicated region
    $region22: #{critic_forward.1} parent=1 // pred_check
      _
    $region23: #{critic_forward.1} parent=1 // pred_check_branch
      %56 = sbr.rel (0) target = $region25
    $region24: #{critic_forward.1} parent=1 // pred_region
      _
    $region25: #{critic_forward.1} parent=1 // pred_fallthru
      _
    // Predicated region
    $region26: #{critic_forward.1} parent=1 // pred_check
      _
    $region27: #{critic_forward.1} parent=1 // pred_check_branch
      %58 = sbr.rel (0) target = $region29
    $region28: #{critic_forward.1} parent=1 // pred_region
      _
    $region29: #{critic_forward.1} parent=1 // pred_fallthru
      _
    // Predicated region
    $region30: #{critic_forward.1} parent=1 // pred_check
      _
    $region31: #{critic_forward.1} parent=1 // pred_check_branch
      %60 = sbr.rel (0) target = $region33
    $region32: #{critic_forward.1} parent=1 // pred_region
      _
    $region33: #{critic_forward.1} parent=1 // pred_fallthru
      _
    // Predicated region
    $region34: #{critic_forward.1} parent=1 // pred_check
      _
    $region35: #{critic_forward.1} parent=1 // pred_check_branch
      %62 = sbr.rel (0) target = $region37
    $region36: #{critic_forward.1} parent=1 // pred_region
      _
    $region37: #{critic_forward.1} parent=1 // pred_fallthru
      _
    // Predicated region
    $region38: #{critic_forward.1} parent=1 // pred_check
      _
    $region39: #{critic_forward.1} parent=1 // pred_check_branch
      %64 = sbr.rel (0) target = $region41
    $region40: #{critic_forward.1} parent=1 // pred_region
      %65 = dma.done [#allocation4], 128
    $region41: #{critic_forward.1} parent=1 // pred_fallthru
      _
    // Predicated region
    $region42: #{critic_forward.1} parent=1 // pred_check
      _
    $region43: #{critic_forward.1} parent=1 // pred_check_branch
      %67 = sbr.rel (0) target = $region45
    $region44: #{critic_forward.1} parent=1 // pred_region
      %68 = dma.done [#allocation7], 256
    $region45: #{critic_forward.1} parent=1 // pred_fallthru
      _
    // Predicated region
    $region46: #{critic_forward.1} parent=1 // pred_check
      _
    $region47: #{critic_forward.1} parent=1 // pred_check_branch
      %70 = sbr.rel (0) target = $region49
    $region48: #{critic_forward.1} parent=1 // pred_region
      %71 = dma.done [#allocation7], 64
    $region49: #{critic_forward.1} parent=1 // pred_fallthru
      _
    %v72 = vld [vmem:[#allocation3] sm:$0xff]
    %v73 = vld [vmem:[#allocation6] sm:$0xff]
    %v74 = vld [vmem:[#allocation6 + $0x8] sm:$0xf]
    %v75 = vld [vmem:[%s1] sm:$0xff]
    %v76 = vld [vmem:[#allocation8] sm:$0xf]
    %vm77 = vcmask 31744
    %v79 = vsel %vm77, %v75, 0
    %vm81 = vcmask 1043456
    %v83 = vsel %vm81, %v76, 0
    %85 = vmatprep.subr.mxu0 0.0
    %86 = vmatpush1.msra.mxu0 0.0
    %87 = vmatprep.subr.mxu0 0.0
    %88 = vmatpush1.msra.mxu0 0.0
    %89 = vmatprep.subr.mxu0 0.0
    %90 = vmatpush1.msra.mxu0 0.0
    %91 = vmatprep.subr.mxu0 0.0
    %92 = vmatpush1.msra.mxu0 0.0
    %93 = vmatprep.subr.mxu0 0.0
    %94 = vmatpush1.msra.mxu0 0.0
    %95 = vmatprep.subr.mxu0 0.0
    %96 = vmatpush1.msra.mxu0 0.0
    %97 = vmatprep.subr.mxu0 0.0
    %98 = vmatpush1.msra.mxu0 0.0
    %99 = vmatprep.subr.mxu0 0.0
    %100 = vmatpush1.msra.mxu0 0.0
    %101 = vmatprep.subr.mxu0 0.0
    %102 = vmatpush1.msra.mxu0 0.0
    %103 = vmatprep.subr.mxu0 0.0
    %104 = vmatpush1.msra.mxu0 0.0
    %105 = vmatprep.subr.mxu0 0.0
    %106 = vmatpush1.msra.mxu0 0.0
    %107 = vmatprep.subr.mxu0 0.0
    %108 = vmatpush1.msra.mxu0 0.0
    %109 = vmatprep.subr.mxu0 0.0
    %110 = vmatpush1.msra.mxu0 0.0
    %111 = vmatprep.subr.mxu0 0.0
    %112 = vmatpush1.msra.mxu0 0.0
    %113 = vmatprep.subr.mxu0 0.0
    %114 = vmatpush1.msra.mxu0 0.0
    %115 = vmatprep.subr.mxu0 0.0
    %116 = vmatpush1.msra.mxu0 %v83
    %117 = vmatprep.subr.mxu0 0.0
    %118 = vmatpush2.msra.mxu0 0.0
    %119 = vmatprep.subr.mxu0 0.0
    %120 = vmatpush2.msra.mxu0 0.0
    %121 = vmatprep.subr.mxu0 0.0
    %122 = vmatpush2.msra.mxu0 0.0
    %123 = vmatprep.subr.mxu0 0.0
    %124 = vmatpush2.msra.mxu0 0.0
    %125 = vmatprep.subr.mxu0 0.0
    %126 = vmatpush2.msra.mxu0 0.0
    %127 = vmatprep.subr.mxu0 0.0
    %128 = vmatpush2.msra.mxu0 0.0
    %129 = vmatprep.subr.mxu0 0.0
    %130 = vmatpush2.msra.mxu0 0.0
    %131 = vmatprep.subr.mxu0 0.0
    %132 = vmatpush2.msra.mxu0 0.0
    %133 = vmatprep.subr.mxu0 0.0
    %134 = vmatpush2.msra.mxu0 0.0
    %135 = vmatprep.subr.mxu0 0.0
    %136 = vmatpush2.msra.mxu0 0.0
    %137 = vmatprep.subr.mxu0 0.0
    %138 = vmatpush2.msra.mxu0 0.0
    %139 = vmatprep.subr.mxu0 0.0
    %140 = vmatpush2.msra.mxu0 0.0
    %141 = vmatprep.subr.mxu0 0.0
    %142 = vmatpush2.msra.mxu0 0.0
    %143 = vmatprep.subr.mxu0 0.0
    %144 = vmatpush2.msra.mxu0 0.0
    %145 = vmatprep.subr.mxu0 0.0
    %146 = vmatpush2.msra.mxu0 0.0
    %147 = vmatprep.subr.mxu0 0.0
    %148 = vmatpush2.msra.mxu0 0.0
    %149 = vmatprep.mubr.f32.mxu0 0.0
    %150 = vmatmul.mubr.f32.gmra.mxu0 %v79
    %v151 = vpop.f32.mrf.mxu0
    %v152 = vadd.f32 0.0, %v151
    %v153 = vpop.f32.mrf.mxu0
    %154 = vdwg.mxu0
    %vm155 = vcmask 97280
    %v157 = vsel %vm155, %v72, 0
    %v160 = vsel %vm81, %v74, 0
    %162 = vmatprep.subr.mxu0 0.0
    %163 = vmatpush1.msra.mxu0 0.0
    %164 = vmatprep.subr.mxu0 0.0
    %165 = vmatpush1.msra.mxu0 0.0
    %166 = vmatprep.subr.mxu0 0.0
    %167 = vmatpush1.msra.mxu0 0.0
    %168 = vmatprep.subr.mxu0 0.0
    %169 = vmatpush1.msra.mxu0 0.0
    %170 = vmatprep.subr.mxu0 0.0
    %171 = vmatpush1.msra.mxu0 0.0
    %172 = vmatprep.subr.mxu0 0.0
    %173 = vmatpush1.msra.mxu0 0.0
    %174 = vmatprep.subr.mxu0 0.0
    %175 = vmatpush1.msra.mxu0 0.0
    %176 = vmatprep.subr.mxu0 0.0
    %177 = vmatpush1.msra.mxu0 0.0
    %178 = vmatprep.subr.mxu0 0.0
    %179 = vmatpush1.msra.mxu0 0.0
    %180 = vmatprep.subr.mxu0 0.0
    %181 = vmatpush1.msra.mxu0 0.0
    %182 = vmatprep.subr.mxu0 0.0
    %183 = vmatpush1.msra.mxu0 0.0
    %184 = vmatprep.subr.mxu0 0.0
    %185 = vmatpush1.msra.mxu0 0.0
    %186 = vmatprep.subr.mxu0 0.0
    %187 = vmatpush1.msra.mxu0 0.0
    %188 = vmatprep.subr.mxu0 0.0
    %189 = vmatpush1.msra.mxu0 0.0
    %190 = vmatprep.subr.mxu0 0.0
    %191 = vmatpush1.msra.mxu0 %v160
    %192 = vmatprep.subr.mxu0 0.0
    %193 = vmatpush1.msra.mxu0 %v73
    %194 = vmatprep.subr.mxu0 0.0
    %195 = vmatpush2.msra.mxu0 0.0
    %196 = vmatprep.subr.mxu0 0.0
    %197 = vmatpush2.msra.mxu0 0.0
    %198 = vmatprep.subr.mxu0 0.0
    %199 = vmatpush2.msra.mxu0 0.0
    %200 = vmatprep.subr.mxu0 0.0
    %201 = vmatpush2.msra.mxu0 0.0
    %202 = vmatprep.subr.mxu0 0.0
    %203 = vmatpush2.msra.mxu0 0.0
    %204 = vmatprep.subr.mxu0 0.0
    %205 = vmatpush2.msra.mxu0 0.0
    %206 = vmatprep.subr.mxu0 0.0
    %207 = vmatpush2.msra.mxu0 0.0
    %208 = vmatprep.subr.mxu0 0.0
    %209 = vmatpush2.msra.mxu0 0.0
    %210 = vmatprep.subr.mxu0 0.0
    %211 = vmatpush2.msra.mxu0 0.0
    %212 = vmatprep.subr.mxu0 0.0
    %213 = vmatpush2.msra.mxu0 0.0
    %214 = vmatprep.subr.mxu0 0.0
    %215 = vmatpush2.msra.mxu0 0.0
    %216 = vmatprep.subr.mxu0 0.0
    %217 = vmatpush2.msra.mxu0 0.0
    %218 = vmatprep.subr.mxu0 0.0
    %219 = vmatpush2.msra.mxu0 0.0
    %220 = vmatprep.subr.mxu0 0.0
    %221 = vmatpush2.msra.mxu0 0.0
    %222 = vmatprep.subr.mxu0 0.0
    %223 = vmatpush2.msra.mxu0 0.0
    %224 = vmatprep.subr.mxu0 0.0
    %225 = vmatpush2.msra.mxu0 0.0
    %226 = vmatprep.mubr.f32.mxu0 0.0
    %227 = vmatmul.mubr.f32.gmra.mxu0 %v157
    %v228 = vpop.f32.mrf.mxu0
    %v229 = vadd.f32 %v152, %v228
    %v230 = vpop.f32.mrf.mxu0
    %231 = vdwg.mxu0
    %v232 = vld [vmem:[%s4] sm:$0x1]
    %v234 = vlaneseq
    %v235 = vshrl.u32 %v234, 7
    %v236 = vsub.s32 0, %v235
    %v237 = vrot.slane %v232, %v236
    %v239 = vadd.f32 %v229, %v237
    %v240 = vmax.f32 %v239, 0.0
    %v241 = vld [vmem:[%s5] sm:$0xff]
    %v242 = vld [vmem:[%s5 + $0x8] sm:$0xff]
    %v243 = vld [vmem:[%s5 + $0x10] sm:$0xff]
    %v244 = vld [vmem:[%s5 + $0x18] sm:$0xff]
    %v245 = vld [vmem:[%s6] sm:$0x1]
    %v247 = vlaneseq
    %v248 = vshrl.u32 %v247, 7
    %v249 = vsub.s32 0, %v248
    %v250 = vrot.slane %v245, %v249
    %vm252 = vcmask 261120
    %v254 = vsel %vm252, %v240, 0
    %256 = vmatprep.subr.mxu0 0.0
    %257 = vmatpush1.msra.mxu0 0.0
    %258 = vmatprep.subr.mxu0 0.0
    %259 = vmatpush1.msra.mxu0 0.0
    %260 = vmatprep.subr.mxu0 0.0
    %261 = vmatpush1.msra.mxu0 0.0
    %262 = vmatprep.subr.mxu0 0.0
    %263 = vmatpush1.msra.mxu0 0.0
    %264 = vmatprep.subr.mxu0 0.0
    %265 = vmatpush1.msra.mxu0 0.0
    %266 = vmatprep.subr.mxu0 0.0
    %267 = vmatpush1.msra.mxu0 0.0
    %268 = vmatprep.subr.mxu0 0.0
    %269 = vmatpush1.msra.mxu0 0.0
    %270 = vmatprep.subr.mxu0 0.0
    %271 = vmatpush1.msra.mxu0 0.0
    %272 = vmatprep.subr.mxu0 0.0
    %273 = vmatpush1.msra.mxu0 0.0
    %274 = vmatprep.subr.mxu0 0.0
    %275 = vmatpush1.msra.mxu0 0.0
    %276 = vmatprep.subr.mxu0 0.0
    %277 = vmatpush1.msra.mxu0 0.0
    %278 = vmatprep.subr.mxu0 0.0
    %279 = vmatpush1.msra.mxu0 0.0
    %280 = vmatprep.subr.mxu0 0.0
    %281 = vmatpush1.msra.mxu0 %v244
    %282 = vmatprep.subr.mxu0 0.0
    %283 = vmatpush1.msra.mxu0 %v243
    %284 = vmatprep.subr.mxu0 0.0
    %285 = vmatpush1.msra.mxu0 %v242
    %286 = vmatprep.subr.mxu0 0.0
    %287 = vmatpush1.msra.mxu0 %v241
    %288 = vmatprep.subr.mxu0 0.0
    %289 = vmatpush2.msra.mxu0 0.0
    %290 = vmatprep.subr.mxu0 0.0
    %291 = vmatpush2.msra.mxu0 0.0
    %292 = vmatprep.subr.mxu0 0.0
    %293 = vmatpush2.msra.mxu0 0.0
    %294 = vmatprep.subr.mxu0 0.0
    %295 = vmatpush2.msra.mxu0 0.0
    %296 = vmatprep.subr.mxu0 0.0
    %297 = vmatpush2.msra.mxu0 0.0
    %298 = vmatprep.subr.mxu0 0.0
    %299 = vmatpush2.msra.mxu0 0.0
    %300 = vmatprep.subr.mxu0 0.0
    %301 = vmatpush2.msra.mxu0 0.0
    %302 = vmatprep.subr.mxu0 0.0
    %303 = vmatpush2.msra.mxu0 0.0
    %304 = vmatprep.subr.mxu0 0.0
    %305 = vmatpush2.msra.mxu0 0.0
    %306 = vmatprep.subr.mxu0 0.0
    %307 = vmatpush2.msra.mxu0 0.0
    %308 = vmatprep.subr.mxu0 0.0
    %309 = vmatpush2.msra.mxu0 0.0
    %310 = vmatprep.subr.mxu0 0.0
    %311 = vmatpush2.msra.mxu0 0.0
    %312 = vmatprep.subr.mxu0 0.0
    %313 = vmatpush2.msra.mxu0 0.0
    %314 = vmatprep.subr.mxu0 0.0
    %315 = vmatpush2.msra.mxu0 0.0
    %316 = vmatprep.subr.mxu0 0.0
    %317 = vmatpush2.msra.mxu0 0.0
    %318 = vmatprep.subr.mxu0 0.0
    %319 = vmatpush2.msra.mxu0 0.0
    %320 = vmatprep.mubr.f32.mxu0 0.0
    %321 = vmatmul.mubr.f32.gmra.mxu0 %v254
    %v322 = vpop.f32.mrf.mxu0
    %v323 = vadd.f32 %v250, %v322
    %v324 = vpop.f32.mrf.mxu0
    %325 = vdwg.mxu0
    %v326 = vmax.f32 %v323, 0.0
    %v327 = vld [vmem:[%s7] sm:$0xff]
    %v329 = vsel %vm252, %v327, 0
    %v332 = vsel %vm252, %v326, 0
    %334 = vmatprep.subr.mxu0 0.0
    %335 = vmatpush1.xpose.msra.mxu0 0.0
    %336 = vmatprep.subr.mxu0 0.0
    %337 = vmatpush1.xpose.msra.mxu0 0.0
    %338 = vmatprep.subr.mxu0 0.0
    %339 = vmatpush1.xpose.msra.mxu0 0.0
    %340 = vmatprep.subr.mxu0 0.0
    %341 = vmatpush1.xpose.msra.mxu0 0.0
    %342 = vmatprep.subr.mxu0 0.0
    %343 = vmatpush1.xpose.msra.mxu0 0.0
    %344 = vmatprep.subr.mxu0 0.0
    %345 = vmatpush1.xpose.msra.mxu0 0.0
    %346 = vmatprep.subr.mxu0 0.0
    %347 = vmatpush1.xpose.msra.mxu0 0.0
    %348 = vmatprep.subr.mxu0 0.0
    %349 = vmatpush1.xpose.msra.mxu0 0.0
    %350 = vmatprep.subr.mxu0 0.0
    %351 = vmatpush1.xpose.msra.mxu0 0.0
    %352 = vmatprep.subr.mxu0 0.0
    %353 = vmatpush1.xpose.msra.mxu0 0.0
    %354 = vmatprep.subr.mxu0 0.0
    %355 = vmatpush1.xpose.msra.mxu0 0.0
    %356 = vmatprep.subr.mxu0 0.0
    %357 = vmatpush1.xpose.msra.mxu0 0.0
    %358 = vmatprep.subr.mxu0 0.0
    %359 = vmatpush1.xpose.msra.mxu0 0.0
    %360 = vmatprep.subr.mxu0 0.0
    %361 = vmatpush1.xpose.msra.mxu0 0.0
    %362 = vmatprep.subr.mxu0 0.0
    %363 = vmatpush1.xpose.msra.mxu0 0.0
    %364 = vmatprep.subr.mxu0 0.0
    %365 = vmatpush1.xpose.msra.mxu0 %v332
    %366 = vmatprep.subr.mxu0 0.0
    %367 = vmatpush2.xpose.msra.mxu0 0.0
    %368 = vmatprep.subr.mxu0 0.0
    %369 = vmatpush2.xpose.msra.mxu0 0.0
    %370 = vmatprep.subr.mxu0 0.0
    %371 = vmatpush2.xpose.msra.mxu0 0.0
    %372 = vmatprep.subr.mxu0 0.0
    %373 = vmatpush2.xpose.msra.mxu0 0.0
    %374 = vmatprep.subr.mxu0 0.0
    %375 = vmatpush2.xpose.msra.mxu0 0.0
    %376 = vmatprep.subr.mxu0 0.0
    %377 = vmatpush2.xpose.msra.mxu0 0.0
    %378 = vmatprep.subr.mxu0 0.0
    %379 = vmatpush2.xpose.msra.mxu0 0.0
    %380 = vmatprep.subr.mxu0 0.0
    %381 = vmatpush2.xpose.msra.mxu0 0.0
    %382 = vmatprep.subr.mxu0 0.0
    %383 = vmatpush2.xpose.msra.mxu0 0.0
    %384 = vmatprep.subr.mxu0 0.0
    %385 = vmatpush2.xpose.msra.mxu0 0.0
    %386 = vmatprep.subr.mxu0 0.0
    %387 = vmatpush2.xpose.msra.mxu0 0.0
    %388 = vmatprep.subr.mxu0 0.0
    %389 = vmatpush2.xpose.msra.mxu0 0.0
    %390 = vmatprep.subr.mxu0 0.0
    %391 = vmatpush2.xpose.msra.mxu0 0.0
    %392 = vmatprep.subr.mxu0 0.0
    %393 = vmatpush2.xpose.msra.mxu0 0.0
    %394 = vmatprep.subr.mxu0 0.0
    %395 = vmatpush2.xpose.msra.mxu0 0.0
    %396 = vmatprep.subr.mxu0 0.0
    %397 = vmatpush2.xpose.msra.mxu0 0.0
    %398 = vmatprep.mubr.f32.mxu0 0.0
    %399 = vmatmul.mubr.f32.gmra.mxu0 %v329
    %v400 = vpop.f32.mrf.mxu0
    %v401 = vadd.f32 0.0, %v400
    %v402 = vpop.f32.mrf.mxu0
    %403 = vdwg.mxu0
    %v404 = vld [vmem:[#allocation2] sm:$0x1]
    %406 = vset.pattern.permute.xlu0 0
    %407 = vperm.xlu0 %406, %v404
    %v408 = vpop.permute.xlu0 %407
    %v410 = vlaneseq
    %v411 = vshrl.u32 %v410, 7
    %v412 = vsub.s32 0, %v411
    %v413 = vrot.slane %v408, %v412
    %v414 = vadd.f32 %v401, %v413
    %vm415 = vcmask 57344
    %416 = vst.msk [vmem:[#allocation9] sm:$0x1] %vm415, %v414
    // Predicated region
    $region50: #{critic_forward.1} parent=1 // pred_check
      _
    $region51: #{critic_forward.1} parent=1 // pred_check_branch
      %418 = sbr.rel (0) target = $region53
    $region52: #{critic_forward.1} parent=1 // pred_region
      %s420 = ssub.s32 16, 16
      %421 = vsyncadd [#allocation5], %s420
      %s423 = sshll.u32 [#allocation9], 4
      %s424 = int_to_ptr.vmem [resolvable:$true] %s423
      %426 = dma.vmem_to_hbm [thread:$0]  %s424, 16, %s9, [#allocation5]
    $region53: #{critic_forward.1} parent=1 // pred_fallthru
      _
    // Predicated region
    $region54: #{critic_forward.1} parent=1 // pred_check
      _
    $region55: #{critic_forward.1} parent=1 // pred_check_branch
      %428 = sbr.rel (0) target = $region57
    $region56: #{critic_forward.1} parent=1 // pred_region
      %429 = dma.done [#allocation5], 16
    $region57: #{critic_forward.1} parent=1 // pred_fallthru
      _
    %430 = vsyncpa [#allocation4], 1
    %431 = vsyncpa [#allocation7], 1
    %432 = vsyncpa [#allocation5], 1

</llo_original>
